<compile_context>
chip_gen: v7x
topology: tpu7x:2x2x1
jax: 0.10.0
libtpu: 0.0.40
codegen_flags: <defaults>
</compile_context>

<pallas_src>
import functools

import jax
import jax.numpy as jnp
from jax.experimental import pallas as pl
from jax.experimental.pallas import tpu as pltpu

_DEFAULT_CHUNK_BYTES = 4 * 1024 * 1024  # per-input-buffer target (feedback: <=4 MiB/buf)


def _variance_over_subgroup(xc, sub):
    """xc: (S, L) chunk in native dtype -> unbiased variance over S, shape (1, L), f32."""
    if sub == 2:
        # Closed form for the common PGGAN case: var = (x0 - x1)^2 / 2.
        d = xc[0:1, :].astype(jnp.float32) - xc[1:2, :].astype(jnp.float32)
        return 0.5 * (d * d)
    xf = xc.astype(jnp.float32)
    mean = jnp.mean(xf, axis=0, keepdims=True)
    dev = xf - mean
    return jnp.sum(dev * dev, axis=0, keepdims=True) * (1.0 / (sub - 1))


def _mbstd_chunk_kernel(x_ref, o_ref, acc_ref, *, n_compute, chw, sub, eps):
    # x_ref: (1, S, TCHW) chunk of the flattened group slab (native dtype)
    # o_ref: (1, S, TCHW) chunk of the flattened output slab  (native dtype)
    # acc_ref: (1, 1) f32 running sum of std over the group
    j = pl.program_id(1)

    @pl.when(j == 0)
    def _init():
        acc_ref[...] = jnp.zeros_like(acc_ref)

    @pl.when(j < n_compute)
    def _compute():
        xc = x_ref[...]                                   # native dtype
        o_ref[...] = xc                                   # pass-through copy
        var = _variance_over_subgroup(xc[0], sub)         # (1, TCHW) f32
        std = jnp.sqrt(var + eps)
        acc_ref[...] += jnp.sum(std, keepdims=True)       # (1, 1)

    @pl.when(j >= n_compute)
    def _finalize():
        # Group statistic is complete; broadcast it over the appended-channel region.
        # Only the in-bounds part of this (partial) output block is written back.
        stat = acc_ref[0, 0] * (1.0 / chw)
        o_ref[...] = jnp.broadcast_to(stat, o_ref.shape).astype(o_ref.dtype)


def _mbstd_full_kernel(x_ref, o_ref, *, chw, hw, sub, eps):
    # Fallback (C*H*W not a multiple of 128): one monolithic block per group,
    # full-dim block shapes so no (8,128) divisibility constraints apply.
    xc = x_ref[...]                                       # (1, S, CHW)
    var = _variance_over_subgroup(xc[0], sub)             # (1, CHW) f32
    std = jnp.sqrt(var + eps)
    stat = jnp.sum(std) * (1.0 / chw)
    o_ref[:, :, 0:chw] = xc
    o_ref[:, :, chw:] = jnp.broadcast_to(stat, (1, sub, hw)).astype(o_ref.dtype)


def _pick_chunk(chw, target_elems):
    """Largest multiple of 128 that divides chw and is <= target_elems."""
    if chw <= target_elems:
        return chw
    d = (target_elems // 128) * 128
    while d >= 128:
        if chw % d == 0:
            return d
        d -= 128
    return 128  # unreachable when chw % 128 == 0


def pallas_pg_minibatch_stddev(x, group_size=2, epsilon=1e-8, *, max_chunk_bytes=None):
    """Forward of PGMiniBatchStddevLayer: returns [N, C+1, H, W]."""
    N, C, H, W = x.shape
    assert N % group_size == 0, "batch size is not divisible by groupsize"
    S = min(N, group_size)
    if S < 2:
        raise ValueError(
            "PGMiniBatchStddevLayer needs a sub-group size >= 2 "
            "(unbiased variance of a single sample is undefined).")
    G = N // S
    HW = H * W
    CHW = C * HW

    # The PyTorch module hardcodes 1e-8 inside sqrt regardless of self.epsilon.
    del epsilon
    eps = 1e-8

    itemsize = jnp.dtype(x.dtype).itemsize
    out_struct = jax.ShapeDtypeStruct((G, S, CHW + HW), x.dtype)
    cost = pl.CostEstimate(
        flops=6 * N * CHW,
        transcendentals=G * CHW,
        bytes_accessed=N * CHW * itemsize + N * (CHW + HW) * itemsize)

    # Contiguous reshape: same grouping as torch's x.view(-1, S, C, H, W) with the
    # per-sample feature dims flattened onto the lane axis (lane-dense for any H, W).
    x_r = x.reshape(G, S, CHW)

    if CHW % 128 == 0:
        # ---- main path: chunked reduction over the flattened C*H*W slab ----
        if max_chunk_bytes is None:
            max_chunk_bytes = _DEFAULT_CHUNK_BYTES
        target_elems = max(128, max_chunk_bytes // (S * itemsize))
        tchw = _pick_chunk(CHW, target_elems)
        n_compute = CHW // tchw                      # chunks carrying real input data
        n_steps = n_compute + pl.cdiv(HW, tchw)      # + finalize steps (appended channel)

        blk_bytes = S * tchw * itemsize
        needed = 4 * blk_bytes + 4 * tchw * 4 + (2 << 20)   # 2x(in+out) bufs + f32 temps
        vmem_limit = int(min(max(needed, 16 * 2**20), 56 * 2**20))

        kernel = functools.partial(
            _mbstd_chunk_kernel, n_compute=n_compute, chw=CHW, sub=S, eps=eps)

        out = pl.pallas_call(
            kernel,
            out_shape=out_struct,
            grid=(G, n_steps),
            in_specs=[pl.BlockSpec(
                (1, S, tchw),
                # Clamp on finalize steps: same block index as the previous step, so
                # the pipeline skips the redundant input DMA.
                lambda g, j: (g, 0, jnp.minimum(j, n_compute - 1)))],
            out_specs=pl.BlockSpec((1, S, tchw), lambda g, j: (g, 0, j)),
            scratch_shapes=[pltpu.VMEM((1, 1), jnp.float32)],
            compiler_params=pltpu.CompilerParams(
                dimension_semantics=("parallel", "arbitrary"),
                vmem_limit_bytes=vmem_limit),
            cost_estimate=cost,
        )(x_r)
    else:
        # ---- fallback for odd shapes (C*H*W not a multiple of 128) ----
        # TODO(synk): monolithic per-group block, no chunk pipelining for such shapes.
        in_blk = S * CHW * itemsize
        out_blk = S * (CHW + HW) * itemsize
        needed = 2 * (in_blk + out_blk) + 4 * CHW * 4 + (2 << 20)
        vmem_limit = int(min(max(needed, 16 * 2**20), 64 * 2**20))

        kernel = functools.partial(_mbstd_full_kernel, chw=CHW, hw=HW, sub=S, eps=eps)
        out = pl.pallas_call(
            kernel,
            out_shape=out_struct,
            grid=(G,),
            in_specs=[pl.BlockSpec((1, S, CHW), lambda g: (g, 0, 0))],
            out_specs=pl.BlockSpec((1, S, CHW + HW), lambda g: (g, 0, 0)),
            compiler_params=pltpu.CompilerParams(
                dimension_semantics=("parallel",),
                vmem_limit_bytes=vmem_limit),
            cost_estimate=cost,
        )(x_r)

    return out.reshape(N, C + 1, H, W)


def reference_pg_minibatch_stddev(x, group_size=2):
    """Pure-JAX reference mirroring the PyTorch module."""
    N, C, H, W = x.shape
    S = min(N, group_size)
    G = N // S
    y = x.reshape(G, S, C, H, W).astype(jnp.float32)
    mean = jnp.mean(y, axis=1, keepdims=True)
    var = jnp.sum((y - mean) ** 2, axis=1) / (S - 1)     # unbiased, like torch.var
    y = jnp.sqrt(var + 1e-8)                             # [G, C, H, W]
    y = y.reshape(G, -1).mean(axis=1)                    # [G]
    y = jnp.broadcast_to(y.reshape(G, 1, 1, 1, 1), (G, S, 1, H, W))
    y = y.reshape(N, 1, H, W).astype(x.dtype)
    return jnp.concatenate([x, y], axis=1)


if __name__ == "__main__":
    key = jax.random.PRNGKey(0)
    k1, k2, k3, k4 = jax.random.split(key, 4)

    # Case 1: shapes implied by the module (batch=2, channels=4, 16x16), one group.
    x1 = jax.random.normal(k1, (2, 4, 16, 16), dtype=jnp.float32)
    y1 = pallas_pg_minibatch_stddev(x1, group_size=2)
    jax.block_until_ready(y1)
    assert y1.shape == (2, 5, 16, 16)
    assert jnp.allclose(y1, reference_pg_minibatch_stddev(x1, 2), atol=1e-5, rtol=1e-5)

    # Case 2: G > 1 (two independent groups on the "parallel" grid axis).
    x2 = jax.random.normal(k2, (4, 8, 8, 16), dtype=jnp.float32)
    y2 = pallas_pg_minibatch_stddev(x2, group_size=2)
    jax.block_until_ready(y2)
    assert y2.shape == (4, 9, 8, 16)
    assert jnp.allclose(y2, reference_pg_minibatch_stddev(x2, 2), atol=1e-5, rtol=1e-5)

    # Case 3: force a multi-chunk reduction (4 compute chunks + 1 finalize step/group).
    x3 = jax.random.normal(k3, (4, 32, 16, 16), dtype=jnp.float32)
    y3 = pallas_pg_minibatch_stddev(x3, group_size=2, max_chunk_bytes=16 * 1024)
    jax.block_until_ready(y3)
    assert y3.shape == (4, 33, 16, 16)
    assert jnp.allclose(y3, reference_pg_minibatch_stddev(x3, 2), atol=1e-5, rtol=1e-5)

    # Case 4: bf16 input (stats in f32, pass-through copy stays bf16).
    x4 = jax.random.normal(k4, (2, 8, 16, 16), dtype=jnp.bfloat16)
    y4 = pallas_pg_minibatch_stddev(x4, group_size=2)
    jax.block_until_ready(y4)
    r4 = reference_pg_minibatch_stddev(x4, 2)
    assert y4.shape == (2, 9, 16, 16)
    assert jnp.allclose(y4.astype(jnp.float32), r4.astype(jnp.float32),
                        atol=2e-2, rtol=2e-2)

    print("KERNEL_OK")
</pallas_src>

<mosaic_0001>
module attributes {stable_mosaic.version = 11 : i64} {
  func.func @_mbstd_chunk_kernel(%arg0: i32, %arg1: i32, %arg2: memref<1x2x1024xf32, #tpu.memory_space<vmem>>, %arg3: memref<1x2x1024xf32, #tpu.memory_space<vmem>>, %arg4: memref<1x1xf32, #tpu.memory_space<vmem>>) attributes {dimension_semantics = [#tpu.dimension_semantics<parallel>, #tpu.dimension_semantics<arbitrary>], iteration_bounds = array<i64: 1, 2>, scalar_prefetch = 0 : i64, scratch_operands = 1 : i64, tpu.core_type = #tpu.core_type<tc>, window_params = [{transform_indices = @transform_0, window_bounds = array<i64: 1, 2, 1024>}, {transform_indices = @transform_1, window_bounds = array<i64: 1, 2, 1024>}]} {
    %c0_i32 = arith.constant 0 : i32
    %0 = arith.cmpi eq, %arg1, %c0_i32 : i32
    %1 = arith.extui %0 : i1 to i32
    %c0_i32_0 = arith.constant 0 : i32
    %2 = arith.cmpi ne, %1, %c0_i32_0 : i32
    scf.if %2 {
      %cst = arith.constant 0.000000e+00 : f32
      %9 = vector.broadcast %cst : f32 to vector<1x1xf32>
      %c0 = arith.constant 0 : index
      %c0_4 = arith.constant 0 : index
      %10 = vector.load %arg4[%c0, %c0_4] : memref<1x1xf32, #tpu.memory_space<vmem>>, vector<1x1xf32>
      tpu.vector_store %arg4[%c0, %c0_4], %9 {strides = array<i32>} : memref<1x1xf32, #tpu.memory_space<vmem>>, vector<1x1xf32>,
    } else {
    }
    %c1_i32 = arith.constant 1 : i32
    %3 = arith.cmpi slt, %arg1, %c1_i32 : i32
    %4 = arith.extui %3 : i1 to i32
    %c0_i32_1 = arith.constant 0 : i32
    %5 = arith.cmpi ne, %4, %c0_i32_1 : i32
    scf.if %5 {
      %c0 = arith.constant 0 : index
      %c0_4 = arith.constant 0 : index
      %c0_5 = arith.constant 0 : index
      %9 = vector.load %arg2[%c0, %c0_4, %c0_5] : memref<1x2x1024xf32, #tpu.memory_space<vmem>>, vector<1x2x1024xf32>
      %c0_6 = arith.constant 0 : index
      %c0_7 = arith.constant 0 : index
      %c0_8 = arith.constant 0 : index
      %10 = vector.load %arg3[%c0_6, %c0_7, %c0_8] : memref<1x2x1024xf32, #tpu.memory_space<vmem>>, vector<1x2x1024xf32>
      tpu.vector_store %arg3[%c0_6, %c0_7, %c0_8], %9 {strides = array<i32>} : memref<1x2x1024xf32, #tpu.memory_space<vmem>>, vector<1x2x1024xf32>,
      %11 = vector.shape_cast %9 : vector<1x2x1024xf32> to vector<2x1024xf32>
      %12 = vector.extract_strided_slice %11 {offsets = [0, 0], sizes = [1, 1024], strides = [1, 1]} : vector<2x1024xf32> to vector<1x1024xf32>
      %13 = vector.extract_strided_slice %11 {offsets = [1, 0], sizes = [1, 1024], strides = [1, 1]} : vector<2x1024xf32> to vector<1x1024xf32>
      %14 = arith.subf %12, %13 : vector<1x1024xf32>
      %15 = arith.mulf %14, %14 : vector<1x1024xf32>
      %cst = arith.constant 5.000000e-01 : f32
      %16 = vector.broadcast %cst : f32 to vector<1x1024xf32>
      %17 = arith.mulf %16, %15 : vector<1x1024xf32>
      %cst_9 = arith.constant 9.99999993E-9 : f32
      %18 = vector.broadcast %cst_9 : f32 to vector<1x1024xf32>
      %19 = arith.addf %17, %18 : vector<1x1024xf32>
      %20 = math.sqrt %19 : vector<1x1024xf32>
      %c0_10 = arith.constant 0 : index
      %c0_11 = arith.constant 0 : index
      %21 = vector.load %arg4[%c0_10, %c0_11] : memref<1x1xf32, #tpu.memory_space<vmem>>, vector<1x1xf32>
      %22 = vector.shape_cast %20 : vector<1x1024xf32> to vector<1x1x1024xf32>
      %cst_12 = arith.constant dense<0.000000e+00> : vector<1xf32>
      %23 = vector.multi_reduction <add>, %22, %cst_12 [1, 2] : vector<1x1x1024xf32> to vector<1xf32>
      %24 = vector.shape_cast %23 : vector<1xf32> to vector<1x1x1xf32>
      %25 = vector.extract %24[0, 0, 0] : f32 from vector<1x1x1xf32>
      %26 = vector.broadcast %25 : f32 to vector<1x1xf32>
      %27 = arith.addf %21, %26 : vector<1x1xf32>
      %c0_13 = arith.constant 0 : index
      %c0_14 = arith.constant 0 : index
      %28 = vector.load %arg4[%c0_13, %c0_14] : memref<1x1xf32, #tpu.memory_space<vmem>>, vector<1x1xf32>
      tpu.vector_store %arg4[%c0_13, %c0_14], %27 {strides = array<i32>} : memref<1x1xf32, #tpu.memory_space<vmem>>, vector<1x1xf32>,
    } else {
    }
    %c1_i32_2 = arith.constant 1 : i32
    %6 = arith.cmpi sge, %arg1, %c1_i32_2 : i32
    %7 = arith.extui %6 : i1 to i32
    %c0_i32_3 = arith.constant 0 : i32
    %8 = arith.cmpi ne, %7, %c0_i32_3 : i32
    scf.if %8 {
      %c0 = arith.constant 0 : index
      %c0_4 = arith.constant 0 : index
      %9 = vector.load %arg4[%c0, %c0_4] : memref<1x1xf32, #tpu.memory_space<vmem>>, vector<1x1xf32>
      %10 = vector.extract %9[0, 0] : f32 from vector<1x1xf32>
      %cst = arith.constant 9.765625E-4 : f32
      %11 = arith.mulf %10, %cst : f32
      %12 = vector.broadcast %11 : f32 to vector<1x2x1024xf32>
      %c0_5 = arith.constant 0 : index
      %c0_6 = arith.constant 0 : index
      %c0_7 = arith.constant 0 : index
      %13 = vector.load %arg3[%c0_5, %c0_6, %c0_7] : memref<1x2x1024xf32, #tpu.memory_space<vmem>>, vector<1x2x1024xf32>
      tpu.vector_store %arg3[%c0_5, %c0_6, %c0_7], %12 {strides = array<i32>} : memref<1x2x1024xf32, #tpu.memory_space<vmem>>, vector<1x2x1024xf32>,
    } else {
    }
    return
  }
  func.func @transform_0(%arg0: i32, %arg1: i32) -> (i32, i32, i32) {
    %c0_i32 = arith.constant 0 : i32
    %0 = arith.minsi %arg1, %c0_i32 : i32
    %c0_i32_0 = arith.constant 0 : i32
    %c0_i32_1 = arith.constant 0 : i32
    return %arg0, %c0_i32_0, %0 : i32, i32, i32
  }
  func.func @transform_1(%arg0: i32, %arg1: i32) -> (i32, i32, i32) {
    %c0_i32 = arith.constant 0 : i32
    %c0_i32_0 = arith.constant 0 : i32
    return %arg0, %c0_i32, %arg1 : i32, i32, i32
  }
}

</mosaic_0001>

<llo_original>
// kernel: tpu_custom_call.1
$region0: #{tpu_custom_call.1}
  #allocation0 [shape = 'u32[]', space=smem, size = 0x4, offset = 0x4, fixed_abs, tag = 'smem constant byte address 0x4 - core index']
  #allocation1 [shape = 'u32[144,128]{1,0:T(1,128)}', space=vmem, size = 0x12000, scoped, tag = 'internal scratch']
  #allocation2 [shape = 'f32[1,1]{1,0:T(1,128)}', space=vmem, size = 0x200, scoped, tag = 'scratch operand']
  %s0 = inlined_call_operand.hbm [shape: f32[1,2,1024], index: 0, kind: input, shape index: {}]
  %s1 = inlined_call_operand.hbm [shape: f32[1,2,1280], index: 1, kind: output, shape index: {}]
  %s2 = sld [smem:[#allocation0]]
  $region53: #{tpu_custom_call.1} parent=0
    _
  %s4 = ssub.s32 1, %s2
  %s5 = scalar_select 0, %s4, %s2
  $region1: #{tpu_custom_call.1} parent=0
    #allocation3 [shape = 'u8[16384]{0}', space=vmem, size = 0x4000, scoped, tag = 'input window, operand 0']
    #allocation4 [shape = 's32[2]{0}', space=sflag, size = 0x8, scoped, tag = 'scoped memory for tpu_custom_call.1']
    #allocation5 [shape = 's32[2]{0}', space=sflag, size = 0x8, scoped, tag = 'scoped memory for tpu_custom_call.1']
    #allocation6 [shape = 'u8[16384]{0}', space=vmem, size = 0x4000, scoped, tag = 'output window, operand 0']
    %6 = vsyncpa [#allocation4], 0
    %s7 = scalar_lea.sflag [#allocation4], 1
    %8 = vsyncpa %s7, 0
    %9 = vsyncpa [#allocation5], 0
    %s10 = scalar_lea.sflag [#allocation5], 1
    %11 = vsyncpa %s10, 0
    loop: start=0, step=1, limit=4
    $region2: #{tpu_custom_call.1} parent=1 // loop_pre_header
      _
    $region3: #{tpu_custom_call.1} parent=1 // loop_header
      %s13 = sphi 0, %s17
      %p14 = scmp.ge.s32.totalorder %s13, 4
      %s20 = sphi 0, %s32
      %s21 = sphi 0, %s28
      %s22 = sphi 0, %s20
      %s23 = sphi 0, %s21
      %s24 = sphi 0, %s22
      %s25 = sphi 0, %s23
      %s41 = sphi 0, %s43
      %s44 = sphi 0, %s41
      %s45 = sphi 0, %s44
      %s61 = sphi 0, %s45
      %s69 = sphi 0, %s71
      %s72 = sphi 0, %s69
      %s73 = sphi 0, %s72
      %s89 = sphi 0, %s73
    $region4: #{tpu_custom_call.1} parent=1 // loop_header_branch
      %16 = sbr.rel (%p14) target = $region8
    $region5: #{tpu_custom_call.1} parent=1 // loop_body
      %s18 = ssub.s32 %s13, 1
      %s19 = ssub.s32 %s13, 2
      %s26 = sadd.s32 1, %s21
      %p27 = scmp.ge.s32.totalorder %s26, 2
      %s28 = scalar_select %p27, 0, %s26
      %s29 = sadd.s32 1, %s20
      %s30 = scalar_select %p27, %s29, %s20
      %p31 = scmp.ge.s32.totalorder %s30, 1
      %s32 = scalar_select %p31, 0, %s30
      %p33 = scmp.lt.s32.totalorder %s21, 0
      %s34 = scalar_select %p33, %s21, 0
      %p35 = scmp.lt.s32.totalorder %s28, 0
      %s36 = scalar_select %p35, %s28, 0
      %s37 = ssub.s32 %s20, %s32
      %s38 = ssub.s32 %s34, %s36
      %s39 = sor.u32 %s37, %s38
      %p40 = scmp.eq.s32.totalorder %s39, 0
      %s42 = sadd.s32 %s41, 1
      %s43 = scalar_select %p40, %s41, %s42
      %p46 = pneg %p40
      %p47 = scmp.eq.s32.totalorder %s13, 1
      %p48 = por %p46, %p47
      %p49 = scmp.ne.s32.totalorder %s41, %s44
      %p50 = scmp.eq.s32.totalorder %s13, 0
      %p51 = por %p49, %p50
      %p52 = scmp.ne.s32.totalorder %s41, %s44
      %p53 = scmp.eq.s32.totalorder %s18, 1
      %p54 = por %p52, %p53
      %p55 = scmp.ne.s32.totalorder %s44, %s45
      %p56 = scmp.eq.s32.totalorder %s18, 0
      %p57 = por %p55, %p56
      %p58 = scmp.ne.s32.totalorder %s44, %s45
      %p59 = scmp.eq.s32.totalorder %s19, 1
      %p60 = por %p58, %p59
      %p62 = scmp.ne.s32.totalorder %s45, %s61
      %p63 = scmp.eq.s32.totalorder %s19, 0
      %p64 = por %p62, %p63
      %s65 = ssub.s32 %s20, %s32
      %s66 = ssub.s32 %s21, %s28
      %s67 = sor.u32 %s65, %s66
      %p68 = scmp.eq.s32.totalorder %s67, 0
      %s70 = sadd.s32 %s69, 1
      %s71 = scalar_select %p68, %s69, %s70
      %p74 = pneg %p68
      %p75 = scmp.eq.s32.totalorder %s13, 1
      %p76 = por %p74, %p75
      %p77 = scmp.ne.s32.totalorder %s69, %s72
      %p78 = scmp.eq.s32.totalorder %s13, 0
      %p79 = por %p77, %p78
      %p80 = scmp.ne.s32.totalorder %s69, %s72
      %p81 = scmp.eq.s32.totalorder %s18, 1
      %p82 = por %p80, %p81
      %p83 = scmp.ne.s32.totalorder %s72, %s73
      %p84 = scmp.eq.s32.totalorder %s18, 0
      %p85 = por %p83, %p84
      %p86 = scmp.ne.s32.totalorder %s72, %s73
      %p87 = scmp.eq.s32.totalorder %s19, 1
      %p88 = por %p86, %p87
      %p90 = scmp.ne.s32.totalorder %s73, %s89
      %p91 = scmp.eq.s32.totalorder %s19, 0
      %p92 = por %p90, %p91
      %p93 = scmp.le.s32.totalorder 1, %s13
      %p94 = scmp.lt.s32.totalorder %s13, 3
      %p95 = pnand %p93, %p94
      %p96 = pneg %p95
      // Predicated region
      $region9: #{tpu_custom_call.1} parent=5 // pred_check
        _
      $region10: #{tpu_custom_call.1} parent=5 // pred_check_branch
        %98 = sbr.rel (%p95) target = $region12
      $region11: #{tpu_custom_call.1} parent=5 // pred_region
        %s99 = ssub.s32 %s13, 1
      $region12: #{tpu_custom_call.1} parent=5 // pred_fallthru
        _
      %p100 = scmp.lt.s32.totalorder %s13, 2
      // Predicated region
      $region13: #{tpu_custom_call.1} parent=5 // pred_check
        %p101 = pneg %p100
      $region14: #{tpu_custom_call.1} parent=5 // pred_check_branch
        %103 = sbr.rel (%p101) target = $region16
      $region15: #{tpu_custom_call.1} parent=5 // pred_region
        // Predicated region
        $region17: #{tpu_custom_call.1} parent=15 // pred_check
          %p104 = pneg %p51
        $region18: #{tpu_custom_call.1} parent=15 // pred_check_branch
          %106 = sbr.rel (%p104) target = $region20
        $region19: #{tpu_custom_call.1} parent=15 // pred_region
          %s107 = sand.u32 %s41, 1
          %s108 = scalar_lea.sflag [#allocation4], %s107
          %s109 = sand.u32 %s41, 1
          %s110 = smul.addr %s109, 16
          %s111 = scalar_lea.vmem [#allocation3], %s110
          %p112 = scmp.lt.s32.totalorder %s21, 0
          %s113 = scalar_select %p112, %s21, 0
          %s114 = smul.u32 8, %s113
          %s116 = ssub.s32 256, 256
          %117 = vsyncadd %s108, %s116
          %s118 = smul.addr %s20, 8
          %s119 = sadd.s32 %s114, %s118
          %s120 = smul.addr %s119, 32
          %s121 = scalar_lea.hbm %s0, %s120
          %s123 = sshll.u32 %s111, 4
          %s124 = int_to_ptr.vmem [resolvable:$true] %s123
          %126 = dma.hbm_to_vmem [thread:$0]  %s121, 256, %s124, %s108
        $region20: #{tpu_custom_call.1} parent=15 // pred_fallthru
          _
      $region16: #{tpu_custom_call.1} parent=5 // pred_fallthru
        _
      %p127 = scmp.le.s32.totalorder 1, %s13
      %p128 = scmp.lt.s32.totalorder %s13, 3
      %p129 = pnand %p127, %p128
      %p130 = pneg %p129
      // Predicated region
      $region21: #{tpu_custom_call.1} parent=5 // pred_check
        _
      $region22: #{tpu_custom_call.1} parent=5 // pred_check_branch
        %132 = sbr.rel (%p129) target = $region24
      $region23: #{tpu_custom_call.1} parent=5 // pred_region
        %s133 = ssub.s32 %s13, 1
        %s134 = sand.u32 %s44, 1
        %s135 = scalar_lea.sflag [#allocation4], %s134
        %s136 = sand.u32 %s44, 1
        %s137 = smul.addr %s136, 16
        %s138 = scalar_lea.vmem [#allocation3], %s137
        // Predicated region
        $region25: #{tpu_custom_call.1} parent=23 // pred_check
          %p139 = pneg %p57
        $region26: #{tpu_custom_call.1} parent=23 // pred_check_branch
          %141 = sbr.rel (%p139) target = $region28
        $region27: #{tpu_custom_call.1} parent=23 // pred_region
          %142 = dma.done %s135, 256
        $region28: #{tpu_custom_call.1} parent=23 // pred_fallthru
          _
        %s143 = sand.u32 %s44, 1
        %s144 = scalar_lea.sflag [#allocation4], %s143
        %s145 = sand.u32 %s44, 1
        %s146 = smul.addr %s145, 16
        %s147 = scalar_lea.vmem [#allocation3], %s146
        %p148 = pneg %p57
        %p149 = pneg %p54
        %p150 = pneg %p85
        %p151 = pneg %p82
        %s152 = sand.u32 %s72, 1
        %s153 = scalar_lea.sflag [#allocation5], %s152
        %s154 = sand.u32 %s72, 1
        %s155 = smul.addr %s154, 16
        %s156 = scalar_lea.vmem [#allocation6], %s155
        %p157 = scmp.lt.s32.totalorder %s23, 0
        %s158 = scalar_select %p157, %s23, 0
        %s159 = smul.u32 8, %s158
        %s160 = smul.u32 8, %s23
        %s161 = ssub.s32 10, %s160
        %p162 = scmp.lt.s32.totalorder %s161, 8
        %s163 = scalar_select %p162, %s161, 8
        %s164 = smul.u32 32, %s163
        %p165 = scmp.eq.s32.totalorder %s23, 0
        // Predicated region
        $region29: #{tpu_custom_call.1} parent=23 // pred_check
          %p166 = pneg %p165
        $region30: #{tpu_custom_call.1} parent=23 // pred_check_branch
          %168 = sbr.rel (%p166) target = $region32
        $region31: #{tpu_custom_call.1} parent=23 // pred_region
          %vm169 = vcmask 0
          %170 = vst.msk [vmem:[#allocation2] sm:$0x1] %vm169, 0.0
        $region32: #{tpu_custom_call.1} parent=23 // pred_fallthru
          _
        %p171 = scmp.lt.s32.totalorder %s23, 1
        // Predicated region
        $region33: #{tpu_custom_call.1} parent=23 // pred_check
          %p172 = pneg %p171
        $region34: #{tpu_custom_call.1} parent=23 // pred_check_branch
          %174 = sbr.rel (%p172) target = $region36
        $region35: #{tpu_custom_call.1} parent=23 // pred_region
          %v175 = vld [vmem:[%s138] sm:$0xff]
          %v176 = vld [vmem:[%s138 + $0x8] sm:$0xff]
          %177 = vst [vmem:[%s156] sm:$0xff] %v175
          %178 = vst [vmem:[%s156 + $0x8] sm:$0xff] %v176
          %v181 = vrot.slane %v175, 7
          %v182 = vrot.slane %v181, 2
          %v183 = vrot.slane %v176, 7
          %v184 = vrot.slane %v183, 2
          %v187 = vsub.f32 %v175, %v182
          %v188 = vsub.f32 %v176, %v184
          %v189 = vmul.f32 %v187, %v187
          %v190 = vmul.f32 %v188, %v188
          %v191 = vmul.f32 %v189, 0.5
          %v192 = vmul.f32 %v190, 0.5
          %v193 = vadd.f32 %v191, 1e-08
          %v194 = vadd.f32 %v192, 1e-08
          %v195 = vrsqrt.pop %v193
          %v196 = vmul.f32 %v193, %v195
          %vm197 = vcmp.eq.f32.partialorder %v193, inf
          %v198 = vsel %vm197, %v193, %v196
          %vm199 = vcmp.eq.f32.partialorder %v193, 0.0
          %v200 = vand.u32 %v193, 2147483648
          %v201 = vsel %vm199, %v200, %v198
          %v202 = vrsqrt.pop %v194
          %v203 = vmul.f32 %v194, %v202
          %vm204 = vcmp.eq.f32.partialorder %v194, inf
          %v205 = vsel %vm204, %v194, %v203
          %vm206 = vcmp.eq.f32.partialorder %v194, 0.0
          %v207 = vand.u32 %v194, 2147483648
          %v208 = vsel %vm206, %v207, %v205
          %v209 = vld [vmem:[#allocation2] sm:$0x1]
          %v212 = vlaneseq
          %v213 = vshrl.u32 %v212, 7
          %v214 = vsub.s32 0, %v213
          %v215 = vrot.slane %v201, %v214
          %v216 = vlaneseq
          %v217 = vshrl.u32 %v216, 7
          %v218 = vsub.s32 2, %v217
          %v219 = vrot.slane %v201, %v218
          %v220 = vlaneseq
          %v221 = vshrl.u32 %v220, 7
          %v222 = vsub.s32 4, %v221
          %v223 = vrot.slane %v201, %v222
          %v224 = vlaneseq
          %v225 = vshrl.u32 %v224, 7
          %v226 = vsub.s32 6, %v225
          %v227 = vrot.slane %v201, %v226
          %v228 = vlaneseq
          %v229 = vshrl.u32 %v228, 7
          %v230 = vsub.s32 0, %v229
          %v231 = vrot.slane %v208, %v230
          %v232 = vlaneseq
          %v233 = vshrl.u32 %v232, 7
          %v234 = vsub.s32 2, %v233
          %v235 = vrot.slane %v208, %v234
          %v236 = vlaneseq
          %v237 = vshrl.u32 %v236, 7
          %v238 = vsub.s32 4, %v237
          %v239 = vrot.slane %v208, %v238
          %v240 = vlaneseq
          %v241 = vshrl.u32 %v240, 7
          %v242 = vsub.s32 6, %v241
          %v243 = vrot.slane %v208, %v242
          %vm252 = vcmask 1040384
          %v253 = vsel %vm252, %v215, 0.0
          %v254 = vsel %vm252, %v219, 0.0
          %v255 = vadd.f32 %v253, %v254
          %v256 = vsel %vm252, %v223, 0.0
          %v257 = vadd.f32 %v255, %v256
          %v258 = vsel %vm252, %v227, 0.0
          %v259 = vadd.f32 %v257, %v258
          %v260 = vsel %vm252, %v231, 0.0
          %v261 = vadd.f32 %v259, %v260
          %v262 = vsel %vm252, %v235, 0.0
          %v263 = vadd.f32 %v261, %v262
          %v264 = vsel %vm252, %v239, 0.0
          %v265 = vadd.f32 %v263, %v264
          %v266 = vsel %vm252, %v243, 0.0
          %v267 = vadd.f32 %v265, %v266
          %268 = vadd.xlane.f32.xlu0 %v267
          %v269 = vpop.xlane.xlu0 %268
          %v270 = vrot.slane %v269, 4
          %v271 = vadd.f32 %v269, %v270
          %v272 = vrot.slane %v271, 2
          %v273 = vadd.f32 %v271, %v272
          %v274 = vrot.slane %v273, 1
          %v275 = vadd.f32 %v273, %v274
          %s276 = vtos %v275
          %v277 = vstv %s276
          %v278 = vadd.f32 %v209, %v277
          %vm279 = vcmask 0
          %280 = vst.msk [vmem:[#allocation2] sm:$0x1] %vm279, %v278
        $region36: #{tpu_custom_call.1} parent=23 // pred_fallthru
          _
        %p281 = scmp.ge.s32.totalorder %s23, 1
        // Predicated region
        $region37: #{tpu_custom_call.1} parent=23 // pred_check
          %p282 = pneg %p281
        $region38: #{tpu_custom_call.1} parent=23 // pred_check_branch
          %284 = sbr.rel (%p282) target = $region40
        $region39: #{tpu_custom_call.1} parent=23 // pred_region
          %v285 = vld [vmem:[#allocation2] sm:$0x1]
          %s286 = vtos %v285
          %s287 = smul.f32 %s286, 0.0009765625
          %v288 = vstv %s287
          %289 = vst [vmem:[%s156] sm:$0xff] %v288
          %290 = vst [vmem:[%s156 + $0x8] sm:$0xff] %v288
        $region40: #{tpu_custom_call.1} parent=23 // pred_fallthru
          _
        %s291 = sand.u32 %s72, 1
        %s292 = scalar_lea.sflag [#allocation5], %s291
        %s293 = sand.u32 %s72, 1
        %s294 = smul.addr %s293, 16
        %s295 = scalar_lea.vmem [#allocation6], %s294
        // Predicated region
        $region41: #{tpu_custom_call.1} parent=23 // pred_check
          %p296 = pneg %p82
        $region42: #{tpu_custom_call.1} parent=23 // pred_check_branch
          %298 = sbr.rel (%p296) target = $region44
        $region43: #{tpu_custom_call.1} parent=23 // pred_region
          %s299 = smul.u32 8, %s23
          %s300 = ssub.s32 10, %s299
          %p301 = scmp.lt.s32.totalorder %s300, 8
          %s302 = scalar_select %p301, %s300, 8
          %s303 = smul.u32 32, %s302
          %s305 = ssub.s32 256, %s303
          %306 = vsyncadd %s292, %s305
          %p307 = scmp.ne.s32.totalorder 0, %s303
          %s308 = smul.addr %s22, 10
          %s309 = sadd.s32 %s299, %s308
          %s310 = smul.addr %s309, 32
          %s311 = scalar_lea.hbm %s1, %s310
          %s312 = smul.u32 %s302, 2
          %s313 = sshll.u32 %s312, 4
          %s314 = sshll.u32 %s295, 4
          %s315 = int_to_ptr.vmem [resolvable:$true] %s314
          %317 = dma.vmem_to_hbm [thread:$0]  (%p307), %s315, %s313, %s311, %s292
        $region44: #{tpu_custom_call.1} parent=23 // pred_fallthru
          _
      $region24: #{tpu_custom_call.1} parent=5 // pred_fallthru
        _
      %p318 = scmp.le.s32.totalorder 2, %s13
      // Predicated region
      $region45: #{tpu_custom_call.1} parent=5 // pred_check
        %p319 = pneg %p318
      $region46: #{tpu_custom_call.1} parent=5 // pred_check_branch
        %321 = sbr.rel (%p319) target = $region48
      $region47: #{tpu_custom_call.1} parent=5 // pred_region
        %s322 = ssub.s32 %s13, 2
        // Predicated region
        $region49: #{tpu_custom_call.1} parent=47 // pred_check
          %p323 = pneg %p88
        $region50: #{tpu_custom_call.1} parent=47 // pred_check_branch
          %325 = sbr.rel (%p323) target = $region52
        $region51: #{tpu_custom_call.1} parent=47 // pred_region
          %s326 = sand.u32 %s73, 1
          %s327 = scalar_lea.sflag [#allocation5], %s326
          %s328 = sand.u32 %s73, 1
          %s329 = smul.addr %s328, 16
          %s330 = scalar_lea.vmem [#allocation6], %s329
          %331 = dma.done %s327, 256
        $region52: #{tpu_custom_call.1} parent=47 // pred_fallthru
          _
      $region48: #{tpu_custom_call.1} parent=5 // pred_fallthru
        _
    $region6: #{tpu_custom_call.1} parent=1 // loop_footer
      %s17 = sadd.s32 1, %s13
    $region7: #{tpu_custom_call.1} parent=1 // loop_footer_branch
      %12 = sbr.rel target = $region3
    $region8: #{tpu_custom_call.1} parent=1 // loop_exit
      _
    %332 = vsyncpa [#allocation4], 1
    %s333 = scalar_lea.sflag [#allocation4], 1
    %334 = vsyncpa %s333, 1
    %335 = vsyncpa [#allocation5], 1
    %s336 = scalar_lea.sflag [#allocation5], 1
    %337 = vsyncpa %s336, 1

</llo_original>
